<compile_context>
chip_gen: v6e
topology: v6e:2x2x1
jax: 0.10.0
libtpu: 0.0.40
codegen_flags: <defaults>
</compile_context>

<pallas_src>
import functools

import jax
import jax.numpy as jnp
from jax.experimental import pallas as pl
from jax.experimental.pallas import tpu as pltpu


def _round_up(x: int, m: int) -> int:
    return ((x + m - 1) // m) * m


def _pick_tile(padded: int, desired: int, align: int) -> int:
    """Largest divisor of `padded` that is a multiple of `align` and <= desired."""
    desired = max(align, min(desired, padded))
    best = align
    t = align
    while t <= desired:
        if padded % t == 0:
            best = t
        t += align
    return best


# ---------------------------------------------------------------------------
# Kernel 1a: fused masked-linear forward (soft / training mask)
#   o[tm, tn] (k==0: = bias) += x[tm, tk] . (w[tn, tk] * mask(s[tn, tk]))
# ---------------------------------------------------------------------------
def _fused_masked_linear_kernel(x_ref, w_ref, s_ref, b_ref, o_ref, *, ticket: bool):
    @pl.when(pl.program_id(2) == 0)
    def _():
        o_ref[...] = jnp.broadcast_to(b_ref[...], o_ref.shape).astype(o_ref.dtype)

    w = w_ref[...]
    s = s_ref[...]
    # Mask is applied in f32, then inputs are cast to bf16 for the MXU
    # (f32 accumulation via preferred_element_type).
    if ticket:
        w_masked = jnp.where(s > 0.0, w, jnp.zeros_like(w))
    else:
        w_masked = w * jax.nn.sigmoid(s)

    o_ref[...] += jax.lax.dot_general(
        x_ref[...].astype(jnp.bfloat16),
        w_masked.astype(jnp.bfloat16),
        dimension_numbers=(((1,), (1,)), ((), ())),
        preferred_element_type=jnp.float32,
    )


# ---------------------------------------------------------------------------
# Kernel 1b: plain linear on a pre-masked weight (static / ticket mask)
# ---------------------------------------------------------------------------
def _linear_kernel(x_ref, w_ref, b_ref, o_ref):
    @pl.when(pl.program_id(2) == 0)
    def _():
        o_ref[...] = jnp.broadcast_to(b_ref[...], o_ref.shape).astype(o_ref.dtype)

    o_ref[...] += jax.lax.dot_general(
        x_ref[...].astype(jnp.bfloat16),
        w_ref[...].astype(jnp.bfloat16),
        dimension_numbers=(((1,), (1,)), ((), ())),
        preferred_element_type=jnp.float32,
    )


def masked_linear(x, w_padded, bias_padded, out_features, *,
                  s_padded=None, ticket: bool = False,
                  tm: int = 512, tn: int = 512, tk: int = 1024):
    """y = x @ W_masked.T + bias.

    `w_padded` / `s_padded` / `bias_padded` are pre-padded to multiples of 128
    (done once by the caller); only x is padded here (batch -> mult of 8).
    If `s_padded is None`, `w_padded` is assumed to already be masked.
    """
    batch, in_f = x.shape
    Np, Kp = w_padded.shape
    Mp = _round_up(batch, 8)

    tm = _pick_tile(Mp, tm, 8)
    tn = _pick_tile(Np, tn, 128)
    tk = _pick_tile(Kp, tk, 128)
    # Keep >= 2 tiles on the parallel (M,N) grid so the second TensorCore
    # (v7x megacore) is not idle when batch is tiny.
    if (Mp // tm) * (Np // tn) < 2 and Np // 128 >= 2:
        tn = _pick_tile(Np, Np // 2, 128)

    # Zero K-padding of x contributes 0 to the contraction; padded M rows and
    # N columns are sliced off below.
    xp = jnp.pad(x, ((0, Mp - batch), (0, Kp - in_f)))

    x_spec = pl.BlockSpec((tm, tk), lambda i, j, k: (i, k))
    w_spec = pl.BlockSpec((tn, tk), lambda i, j, k: (j, k))
    b_spec = pl.BlockSpec((1, tn), lambda i, j, k: (0, j))
    o_spec = pl.BlockSpec((tm, tn), lambda i, j, k: (i, j))

    if s_padded is None:
        kernel = _linear_kernel
        in_specs = [x_spec, w_spec, b_spec]
        operands = (xp, w_padded, bias_padded)
    else:
        kernel = functools.partial(_fused_masked_linear_kernel, ticket=ticket)
        in_specs = [x_spec, w_spec, w_spec, b_spec]
        operands = (xp, w_padded, s_padded, bias_padded)

    out = pl.pallas_call(
        kernel,
        out_shape=jax.ShapeDtypeStruct((Mp, Np), jnp.float32),
        grid_spec=pltpu.PrefetchScalarGridSpec(
            num_scalar_prefetch=0,
            grid=(Mp // tm, Np // tn, Kp // tk),
            in_specs=in_specs,
            out_specs=o_spec,
        ),
        compiler_params=pltpu.CompilerParams(
            dimension_semantics=("parallel", "parallel", "arbitrary"),
            vmem_limit_bytes=32 * 1024 * 1024,
        ),
    )(*operands)
    return out[:batch, :out_features]


# ---------------------------------------------------------------------------
# Kernel 2: materialize b_matrix (tiled on both dims, block bytes capped)
# ---------------------------------------------------------------------------
def _compute_mask_kernel(s_ref, b_ref, *, ticket: bool):
    s = s_ref[...]
    if ticket:
        b_ref[...] = (s > 0.0).astype(b_ref.dtype)
    else:
        b_ref[...] = jax.nn.sigmoid(s).astype(b_ref.dtype)


def _elementwise_tiles(Rp, Cp, max_block_bytes=2 * 1024 * 1024):
    ct = _pick_tile(Cp, 2048, 128)
    rt = _pick_tile(Rp, max(8, max_block_bytes // (4 * ct)), 8)
    return rt, ct


def compute_mask(s_matrix: jax.Array, ticket: bool) -> jax.Array:
    out_f, in_f = s_matrix.shape
    Rp, Cp = _round_up(out_f, 8), _round_up(in_f, 128)
    rt, ct = _elementwise_tiles(Rp, Cp)
    sp = jnp.pad(s_matrix, ((0, Rp - out_f), (0, Cp - in_f)))

    out = pl.pallas_call(
        functools.partial(_compute_mask_kernel, ticket=ticket),
        out_shape=jax.ShapeDtypeStruct((Rp, Cp), s_matrix.dtype),
        grid=(Rp // rt, Cp // ct),
        in_specs=[pl.BlockSpec((rt, ct), lambda i, j: (i, j))],
        out_specs=pl.BlockSpec((rt, ct), lambda i, j: (i, j)),
        compiler_params=pltpu.CompilerParams(
            dimension_semantics=("parallel", "parallel")),
    )(sp)
    return out[:out_f, :in_f]


# ---------------------------------------------------------------------------
# Kernel 3: pre-mask the (padded) weight once for the static-mask fast path
# ---------------------------------------------------------------------------
def _apply_mask_kernel(w_ref, s_ref, o_ref, *, ticket: bool):
    w = w_ref[...]
    s = s_ref[...]
    if ticket:
        o_ref[...] = jnp.where(s > 0.0, w, jnp.zeros_like(w)).astype(o_ref.dtype)
    else:
        o_ref[...] = (w * jax.nn.sigmoid(s)).astype(o_ref.dtype)


def apply_mask_to_weight(w_padded, s_padded, *, ticket: bool) -> jax.Array:
    Rp, Cp = w_padded.shape  # already (mult of 128, mult of 128)
    rt, ct = _elementwise_tiles(Rp, Cp)
    return pl.pallas_call(
        functools.partial(_apply_mask_kernel, ticket=ticket),
        out_shape=jax.ShapeDtypeStruct((Rp, Cp), w_padded.dtype),
        grid=(Rp // rt, Cp // ct),
        in_specs=[pl.BlockSpec((rt, ct), lambda i, j: (i, j)),
                  pl.BlockSpec((rt, ct), lambda i, j: (i, j))],
        out_specs=pl.BlockSpec((rt, ct), lambda i, j: (i, j)),
        compiler_params=pltpu.CompilerParams(
            dimension_semantics=("parallel", "parallel")),
    )(w_padded, s_padded)


# ---------------------------------------------------------------------------
# Kernel 4: compute_remaining_mask — tiled int32 reduction, no EUP work
# ---------------------------------------------------------------------------
def _count_remaining_kernel(s_ref, o_ref, *, ticket: bool):
    @pl.when((pl.program_id(0) == 0) & (pl.program_id(1) == 0))
    def _():
        o_ref[...] = jnp.zeros_like(o_ref)

    s = s_ref[...]
    # sigmoid(s) > 0 in f32 for all s above the underflow threshold (~-88),
    # so a direct compare is exact here and avoids a full EUP sigmoid pass.
    thresh = 0.0 if ticket else -88.0
    o_ref[...] += jnp.sum((s > thresh).astype(jnp.int32)).reshape(1, 1)


def count_remaining(s_matrix: jax.Array, ticket: bool) -> jax.Array:
    out_f, in_f = s_matrix.shape
    Rp, Cp = _round_up(out_f, 8), _round_up(in_f, 128)
    rt, ct = _elementwise_tiles(Rp, Cp)
    # Pad with a very negative value so padded entries never count.
    sp = jnp.pad(s_matrix, ((0, Rp - out_f), (0, Cp - in_f)),
                 constant_values=-1e30)

    out = pl.pallas_call(
        functools.partial(_count_remaining_kernel, ticket=ticket),
        out_shape=jax.ShapeDtypeStruct((1, 1), jnp.int32),
        grid=(Rp // rt, Cp // ct),
        in_specs=[pl.BlockSpec((rt, ct), lambda i, j: (i, j))],
        out_specs=pl.BlockSpec((1, 1), lambda i, j: (0, 0)),
        compiler_params=pltpu.CompilerParams(
            dimension_semantics=("arbitrary", "arbitrary")),
    )(sp)
    return out[0, 0]


# ---------------------------------------------------------------------------
# Thin python wrapper mimicking the MaskedLayer module
# ---------------------------------------------------------------------------
class MaskedLinearPallas:
    def __init__(self, in_features, out_features, ticket=False, key=None):
        self.ticket = ticket
        self.in_features = in_features
        self.out_features = out_features
        if key is None:
            key = jax.random.PRNGKey(0)
        kw, kb, ks = jax.random.split(key, 3)
        self.weight = jax.random.normal(
            kw, (out_features, in_features), jnp.float32) * 0.1
        self.bias = jax.random.normal(kb, (out_features,), jnp.float32) * 0.1
        self.s_matrix = self.init_s_matrix(ks)
        self.b_matrix = None  # materialized only on demand

        # Pad weight-shaped params ONCE (not per forward call):
        # out_features -> mult of 128 (lane-dense N), in_features -> mult of 128 (K).
        Np = _round_up(out_features, 128)
        Kp = _round_up(in_features, 128)
        self._wp = jnp.pad(self.weight,
                           ((0, Np - out_features), (0, Kp - in_features)))
        self._sp = jnp.pad(self.s_matrix,
                           ((0, Np - out_features), (0, Kp - in_features)))
        self._bp = jnp.pad(self.bias.reshape(1, out_features),
                           ((0, 0), (0, Np - out_features)))
        self._wmasked_p = None  # cached pre-masked weight (static-mask path)

    def init_s_matrix(self, key):
        return jax.random.normal(
            key, (self.out_features, self.in_features), jnp.float32)

    def compute_mask(self):
        self.b_matrix = compute_mask(self.s_matrix, self.ticket)

    def forward(self, x):
        if self.ticket:
            # Static hard mask: pre-mask the weight once, then stream only the
            # masked weight (half the weight HBM bytes per forward).
            if self._wmasked_p is None:
                self._wmasked_p = apply_mask_to_weight(
                    self._wp, self._sp, ticket=True)
            return masked_linear(x, self._wmasked_p, self._bp,
                                 self.out_features)
        # Soft (training) mask: sigmoid(s) * w fused into the matmul kernel.
        return masked_linear(x, self._wp, self._bp, self.out_features,
                             s_padded=self._sp, ticket=False)

    def compute_l1_norm(self):
        return jnp.sum(jnp.abs(self.s_matrix))

    def compute_remaining_mask(self, fraction: bool = True) -> float:
        above_zero = float(count_remaining(self.s_matrix, self.ticket))
        if not fraction:
            return above_zero
        return above_zero / self.s_matrix.size

    def extra_repr(self) -> str:
        return (f"in_features={self.in_features}, "
                f"out_features={self.out_features}, ticket={self.ticket}")


if __name__ == "__main__":
    # Small shapes that still exercise M/N/K padding and tile selection.
    batch, in_features, out_features = 6, 640, 96
    key = jax.random.PRNGKey(0)
    kx, kp = jax.random.split(key)
    x = jax.random.normal(kx, (batch, in_features), jnp.float32)

    # ---- soft (sigmoid) mask path -------------------------------------
    layer = MaskedLinearPallas(in_features, out_features, ticket=False, key=kp)
    y = jax.block_until_ready(layer.forward(x))
    assert y.shape == (batch, out_features)

    mask_ref = jax.nn.sigmoid(layer.s_matrix)
    wm_ref = layer.weight * mask_ref
    # Reference built with the same precision recipe as the kernel
    # (mask applied in f32, matmul with bf16 inputs / f32 accumulation).
    y_ref = jnp.dot(x.astype(jnp.bfloat16), wm_ref.astype(jnp.bfloat16).T,
                    preferred_element_type=jnp.float32) + layer.bias
    assert jnp.allclose(y, y_ref, atol=1e-2, rtol=1e-2), "forward mismatch"

    frac = layer.compute_remaining_mask(fraction=True)
    frac_ref = float(jnp.sum(mask_ref > 0)) / layer.s_matrix.size
    assert abs(frac - frac_ref) < 1e-6, "remaining mask mismatch"

    layer.compute_mask()
    assert jnp.allclose(layer.b_matrix, mask_ref, atol=1e-6, rtol=1e-6), \
        "compute_mask mismatch"

    # ---- hard (ticket) mask path --------------------------------------
    layer_t = MaskedLinearPallas(in_features, out_features, ticket=True, key=kp)
    y_t = jax.block_until_ready(layer_t.forward(x))

    mask_t_ref = (layer_t.s_matrix > 0).astype(jnp.float32)
    wt_ref = layer_t.weight * mask_t_ref
    y_t_ref = jnp.dot(x.astype(jnp.bfloat16), wt_ref.astype(jnp.bfloat16).T,
                      preferred_element_type=jnp.float32) + layer_t.bias
    assert jnp.allclose(y_t, y_t_ref, atol=1e-2, rtol=1e-2), \
        "ticket forward mismatch"

    frac_t = layer_t.compute_remaining_mask(fraction=True)
    frac_t_ref = float(jnp.sum(mask_t_ref > 0)) / layer_t.s_matrix.size
    assert abs(frac_t - frac_t_ref) < 1e-6, "ticket remaining mask mismatch"

    print("KERNEL_OK")
</pallas_src>

<mosaic_0001>
module attributes {stable_mosaic.version = 11 : i64} {
  func.func @_fused_masked_linear_kernel(%arg0: i32, %arg1: i32, %arg2: i32, %arg3: memref<8x640xf32, #tpu.memory_space<vmem>>, %arg4: memref<128x640xf32, #tpu.memory_space<vmem>>, %arg5: memref<128x640xf32, #tpu.memory_space<vmem>>, %arg6: memref<1x128xf32, #tpu.memory_space<vmem>>, %arg7: memref<8x128xf32, #tpu.memory_space<vmem>>) attributes {dimension_semantics = [#tpu.dimension_semantics<parallel>, #tpu.dimension_semantics<parallel>, #tpu.dimension_semantics<arbitrary>], iteration_bounds = array<i64: 1, 1, 1>, scalar_prefetch = 0 : i64, scratch_operands = 0 : i64, tpu.core_type = #tpu.core_type<tc>, window_params = [{transform_indices = @transform_0, window_bounds = array<i64: 8, 640>}, {transform_indices = @transform_1, window_bounds = array<i64: 128, 640>}, {transform_indices = @transform_2, window_bounds = array<i64: 128, 640>}, {transform_indices = @transform_3, window_bounds = array<i64: 1, 128>}, {transform_indices = @transform_4, window_bounds = array<i64: 8, 128>}]} {
    %c0_i32 = arith.constant 0 : i32
    %0 = arith.cmpi eq, %arg2, %c0_i32 : i32
    %1 = arith.extui %0 : i1 to i32
    %c0_i32_0 = arith.constant 0 : i32
    %2 = arith.cmpi ne, %1, %c0_i32_0 : i32
    scf.if %2 {
      %c0_11 = arith.constant 0 : index
      %c0_12 = arith.constant 0 : index
      %18 = vector.load %arg6[%c0_11, %c0_12] : memref<1x128xf32, #tpu.memory_space<vmem>>, vector<1x128xf32>
      %19 = vector.shape_cast %18 : vector<1x128xf32> to vector<1x128xf32>
      %20 = vector.broadcast %19 : vector<1x128xf32> to vector<8x128xf32>
      %c0_13 = arith.constant 0 : index
      %c0_14 = arith.constant 0 : index
      %21 = vector.load %arg7[%c0_13, %c0_14] : memref<8x128xf32, #tpu.memory_space<vmem>>, vector<8x128xf32>
      tpu.vector_store %arg7[%c0_13, %c0_14], %20 {strides = array<i32>} : memref<8x128xf32, #tpu.memory_space<vmem>>, vector<8x128xf32>,
    } else {
    }
    %c0 = arith.constant 0 : index
    %c0_1 = arith.constant 0 : index
    %3 = vector.load %arg4[%c0, %c0_1] : memref<128x640xf32, #tpu.memory_space<vmem>>, vector<128x640xf32>
    %c0_2 = arith.constant 0 : index
    %c0_3 = arith.constant 0 : index
    %4 = vector.load %arg5[%c0_2, %c0_3] : memref<128x640xf32, #tpu.memory_space<vmem>>, vector<128x640xf32>
    %5 = arith.negf %4 : vector<128x640xf32>
    %6 = math.exp %5 : vector<128x640xf32>
    %cst = arith.constant 1.000000e+00 : f32
    %7 = vector.broadcast %cst : f32 to vector<128x640xf32>
    %8 = arith.addf %7, %6 : vector<128x640xf32>
    %9 = arith.divf %7, %8 : vector<128x640xf32>
    %10 = arith.mulf %3, %9 : vector<128x640xf32>
    %c0_4 = arith.constant 0 : index
    %c0_5 = arith.constant 0 : index
    %11 = vector.load %arg7[%c0_4, %c0_5] : memref<8x128xf32, #tpu.memory_space<vmem>>, vector<8x128xf32>
    %c0_6 = arith.constant 0 : index
    %c0_7 = arith.constant 0 : index
    %12 = vector.load %arg3[%c0_6, %c0_7] : memref<8x640xf32, #tpu.memory_space<vmem>>, vector<8x640xf32>
    %13 = arith.truncf %12 : vector<8x640xf32> to vector<8x640xbf16>
    %14 = arith.truncf %10 : vector<128x640xf32> to vector<128x640xbf16>
    %cst_8 = arith.constant dense<0.000000e+00> : vector<8x128xf32>
    %15 = tpu.matmul %13, %14, %cst_8 {dimension_numbers = #tpu.dot_dimension_numbers<[1], [1], [0], [0], [0, 0, 1, 0], [], []>} : vector<8x640xbf16>, vector<128x640xbf16>, vector<8x128xf32> -> vector<8x128xf32>
    %16 = arith.addf %11, %15 : vector<8x128xf32>
    %c0_9 = arith.constant 0 : index
    %c0_10 = arith.constant 0 : index
    %17 = vector.load %arg7[%c0_9, %c0_10] : memref<8x128xf32, #tpu.memory_space<vmem>>, vector<8x128xf32>
    tpu.vector_store %arg7[%c0_9, %c0_10], %16 {strides = array<i32>} : memref<8x128xf32, #tpu.memory_space<vmem>>, vector<8x128xf32>,
    return
  }
  func.func @transform_0(%arg0: i32, %arg1: i32, %arg2: i32) -> (i32, i32) {
    %c0_i32 = arith.constant 0 : i32
    return %arg0, %arg2 : i32, i32
  }
  func.func @transform_1(%arg0: i32, %arg1: i32, %arg2: i32) -> (i32, i32) {
    %c0_i32 = arith.constant 0 : i32
    return %arg1, %arg2 : i32, i32
  }
  func.func @transform_2(%arg0: i32, %arg1: i32, %arg2: i32) -> (i32, i32) {
    %c0_i32 = arith.constant 0 : i32
    return %arg1, %arg2 : i32, i32
  }
  func.func @transform_3(%arg0: i32, %arg1: i32, %arg2: i32) -> (i32, i32) {
    %c0_i32 = arith.constant 0 : i32
    %c0_i32_0 = arith.constant 0 : i32
    return %c0_i32, %arg1 : i32, i32
  }
  func.func @transform_4(%arg0: i32, %arg1: i32, %arg2: i32) -> (i32, i32) {
    %c0_i32 = arith.constant 0 : i32
    return %arg0, %arg1 : i32, i32
  }
}

</mosaic_0001>

<llo_original>
// kernel: tpu_custom_call.1
$region0: #{tpu_custom_call.1}
  #allocation0 [shape = 'u32[]', space=smem, size = 0x4, offset = 0x4, fixed_abs, tag = 'smem constant byte address 0x4 - core index']
  #allocation1 [shape = 'u32[144,128]{1,0:T(1,128)}', space=vmem, size = 0x12000, scoped, tag = 'internal scratch']
  %s0 = inlined_call_operand.hbm [shape: f32[8,640], index: 0, kind: input, shape index: {}]
  %s1 = inlined_call_operand.hbm [shape: f32[128,640], index: 1, kind: input, shape index: {}]
  %s2 = inlined_call_operand.hbm [shape: f32[128,640], index: 2, kind: input, shape index: {}]
  %s3 = inlined_call_operand.vmem [shape: f32[1,128], index: 3, kind: input, shape index: {}]
  %s4 = inlined_call_operand.hbm [shape: f32[8,128], index: 4, kind: output, shape index: {}]
  %s5 = sld [smem:[#allocation0]]
  $region42: #{tpu_custom_call.1} parent=0
    _
  %s7 = ssub.s32 1, %s5
  %s8 = scalar_select 0, %s7, %s5
  $region1: #{tpu_custom_call.1} parent=0
    #allocation2 [shape = 'u8[20480]{0}', space=vmem, size = 0x5000, scoped, tag = 'input window, operand 0, single buffered']
    #allocation3 [shape = 's32[1]{0}', space=sflag, size = 0x4, scoped, tag = 'scoped memory for tpu_custom_call.1']
    #allocation4 [shape = 's32[1]{0}', space=sflag, size = 0x4, scoped, tag = 'scoped memory for tpu_custom_call.1']
    #allocation5 [shape = 'u8[327680]{0}', space=vmem, size = 0x50000, scoped, tag = 'input window, operand 1, single buffered']
    #allocation6 [shape = 's32[1]{0}', space=sflag, size = 0x4, scoped, tag = 'scoped memory for tpu_custom_call.1']
    #allocation7 [shape = 'u8[327680]{0}', space=vmem, size = 0x50000, scoped, tag = 'input window, operand 2, single buffered']
    #allocation8 [shape = 'u8[4096]{0}', space=vmem, size = 0x1000, scoped, tag = 'output window, operand 0, single buffered']
    %9 = vsyncpa [#allocation3], 0
    %10 = vsyncpa [#allocation6], 0
    %11 = vsyncpa [#allocation4], 0
    // Predicated region
    $region2: #{tpu_custom_call.1} parent=1 // pred_check
      _
    $region3: #{tpu_custom_call.1} parent=1 // pred_check_branch
      %13 = sbr.rel (0) target = $region5
    $region4: #{tpu_custom_call.1} parent=1 // pred_region
      %s15 = ssub.s32 640, 640
      %16 = vsyncadd [#allocation3], %s15
      %s18 = sshll.u32 [#allocation2], 4
      %s19 = int_to_ptr.vmem [resolvable:$true] %s18
      %21 = dma.hbm_to_vmem [thread:$0]  %s0, 640, %s19, [#allocation3]
    $region5: #{tpu_custom_call.1} parent=1 // pred_fallthru
      _
    // Predicated region
    $region6: #{tpu_custom_call.1} parent=1 // pred_check
      _
    $region7: #{tpu_custom_call.1} parent=1 // pred_check_branch
      %23 = sbr.rel (0) target = $region9
    $region8: #{tpu_custom_call.1} parent=1 // pred_region
      %s25 = ssub.s32 10240, 10240
      %26 = vsyncadd [#allocation6], %s25
      %s27 = sshll.u32 [#allocation5], 4
      %s28 = int_to_ptr.vmem [resolvable:$true] %s27
      %33 = dma.hbm_to_vmem [thread:$0]  %s1, 10240, %s28, [#allocation6], 640, 640, 40
    $region9: #{tpu_custom_call.1} parent=1 // pred_fallthru
      _
    // Predicated region
    $region10: #{tpu_custom_call.1} parent=1 // pred_check
      _
    $region11: #{tpu_custom_call.1} parent=1 // pred_check_branch
      %35 = sbr.rel (0) target = $region13
    $region12: #{tpu_custom_call.1} parent=1 // pred_region
      %s37 = ssub.s32 10240, 10240
      %38 = vsyncadd [#allocation6], %s37
      %s39 = sshll.u32 [#allocation7], 4
      %s40 = int_to_ptr.vmem [resolvable:$true] %s39
      %45 = dma.hbm_to_vmem [thread:$0]  %s2, 10240, %s40, [#allocation6], 640, 640, 40
    $region13: #{tpu_custom_call.1} parent=1 // pred_fallthru
      _
    // Predicated region
    $region14: #{tpu_custom_call.1} parent=1 // pred_check
      _
    $region15: #{tpu_custom_call.1} parent=1 // pred_check_branch
      %47 = sbr.rel (0) target = $region17
    $region16: #{tpu_custom_call.1} parent=1 // pred_region
      _
    $region17: #{tpu_custom_call.1} parent=1 // pred_fallthru
      _
    // Predicated region
    $region18: #{tpu_custom_call.1} parent=1 // pred_check
      _
    $region19: #{tpu_custom_call.1} parent=1 // pred_check_branch
      %49 = sbr.rel (0) target = $region21
    $region20: #{tpu_custom_call.1} parent=1 // pred_region
      %50 = dma.done [#allocation3], 640
    $region21: #{tpu_custom_call.1} parent=1 // pred_fallthru
      _
    // Predicated region
    $region22: #{tpu_custom_call.1} parent=1 // pred_check
      _
    $region23: #{tpu_custom_call.1} parent=1 // pred_check_branch
      %52 = sbr.rel (0) target = $region25
    $region24: #{tpu_custom_call.1} parent=1 // pred_region
      %53 = dma.done [#allocation6], 10240
    $region25: #{tpu_custom_call.1} parent=1 // pred_fallthru
      _
    // Predicated region
    $region26: #{tpu_custom_call.1} parent=1 // pred_check
      _
    $region27: #{tpu_custom_call.1} parent=1 // pred_check_branch
      %55 = sbr.rel (0) target = $region29
    $region28: #{tpu_custom_call.1} parent=1 // pred_region
      %56 = dma.done [#allocation6], 10240
    $region29: #{tpu_custom_call.1} parent=1 // pred_fallthru
      _
    %p58 = scmp.eq.s32.totalorder 0, 0
    // Predicated region
    $region30: #{tpu_custom_call.1} parent=1 // pred_check
      %p59 = pneg %p58
    $region31: #{tpu_custom_call.1} parent=1 // pred_check_branch
      %61 = sbr.rel (%p59) target = $region33
    $region32: #{tpu_custom_call.1} parent=1 // pred_region
      %v62 = vld [vmem:[%s3] sm:$0x1]
      %v64 = vlaneseq
      %v65 = vshrl.u32 %v64, 7
      %v66 = vsub.s32 0, %v65
      %v67 = vrot.slane %v62, %v66
      %69 = vst [vmem:[#allocation8] sm:$0xff] %v67
    $region33: #{tpu_custom_call.1} parent=1 // pred_fallthru
      _
    %v70 = vld [vmem:[#allocation5] sm:$0xff]
    %v71 = vld [vmem:[#allocation5 + $0x8] sm:$0xff]
    %v72 = vld [vmem:[#allocation5 + $0x10] sm:$0xff]
    %v73 = vld [vmem:[#allocation5 + $0x18] sm:$0xff]
    %v74 = vld [vmem:[#allocation5 + $0x20] sm:$0xff]
    %v75 = vld [vmem:[#allocation5 + $0x28] sm:$0xff]
    %v76 = vld [vmem:[#allocation5 + $0x30] sm:$0xff]
    %v77 = vld [vmem:[#allocation5 + $0x38] sm:$0xff]
    %v78 = vld [vmem:[#allocation5 + $0x40] sm:$0xff]
    %v79 = vld [vmem:[#allocation5 + $0x48] sm:$0xff]
    %v80 = vld [vmem:[#allocation5 + $0x50] sm:$0xff]
    %v81 = vld [vmem:[#allocation5 + $0x58] sm:$0xff]
    %v82 = vld [vmem:[#allocation5 + $0x60] sm:$0xff]
    %v83 = vld [vmem:[#allocation5 + $0x68] sm:$0xff]
    %v84 = vld [vmem:[#allocation5 + $0x70] sm:$0xff]
    %v85 = vld [vmem:[#allocation5 + $0x78] sm:$0xff]
    %v86 = vld [vmem:[#allocation5 + $0x80] sm:$0xff]
    %v87 = vld [vmem:[#allocation5 + $0x88] sm:$0xff]
    %v88 = vld [vmem:[#allocation5 + $0x90] sm:$0xff]
    %v89 = vld [vmem:[#allocation5 + $0x98] sm:$0xff]
    %v90 = vld [vmem:[#allocation5 + $0xa0] sm:$0xff]
    %v91 = vld [vmem:[#allocation5 + $0xa8] sm:$0xff]
    %v92 = vld [vmem:[#allocation5 + $0xb0] sm:$0xff]
    %v93 = vld [vmem:[#allocation5 + $0xb8] sm:$0xff]
    %v94 = vld [vmem:[#allocation5 + $0xc0] sm:$0xff]
    %v95 = vld [vmem:[#allocation5 + $0xc8] sm:$0xff]
    %v96 = vld [vmem:[#allocation5 + $0xd0] sm:$0xff]
    %v97 = vld [vmem:[#allocation5 + $0xd8] sm:$0xff]
    %v98 = vld [vmem:[#allocation5 + $0xe0] sm:$0xff]
    %v99 = vld [vmem:[#allocation5 + $0xe8] sm:$0xff]
    %v100 = vld [vmem:[#allocation5 + $0xf0] sm:$0xff]
    %v101 = vld [vmem:[#allocation5 + $0xf8] sm:$0xff]
    %v102 = vld [vmem:[#allocation5 + $0x100] sm:$0xff]
    %v103 = vld [vmem:[#allocation5 + $0x108] sm:$0xff]
    %v104 = vld [vmem:[#allocation5 + $0x110] sm:$0xff]
    %v105 = vld [vmem:[#allocation5 + $0x118] sm:$0xff]
    %v106 = vld [vmem:[#allocation5 + $0x120] sm:$0xff]
    %v107 = vld [vmem:[#allocation5 + $0x128] sm:$0xff]
    %v108 = vld [vmem:[#allocation5 + $0x130] sm:$0xff]
    %v109 = vld [vmem:[#allocation5 + $0x138] sm:$0xff]
    %v110 = vld [vmem:[#allocation5 + $0x140] sm:$0xff]
    %v111 = vld [vmem:[#allocation5 + $0x148] sm:$0xff]
    %v112 = vld [vmem:[#allocation5 + $0x150] sm:$0xff]
    %v113 = vld [vmem:[#allocation5 + $0x158] sm:$0xff]
    %v114 = vld [vmem:[#allocation5 + $0x160] sm:$0xff]
    %v115 = vld [vmem:[#allocation5 + $0x168] sm:$0xff]
    %v116 = vld [vmem:[#allocation5 + $0x170] sm:$0xff]
    %v117 = vld [vmem:[#allocation5 + $0x178] sm:$0xff]
    %v118 = vld [vmem:[#allocation5 + $0x180] sm:$0xff]
    %v119 = vld [vmem:[#allocation5 + $0x188] sm:$0xff]
    %v120 = vld [vmem:[#allocation5 + $0x190] sm:$0xff]
    %v121 = vld [vmem:[#allocation5 + $0x198] sm:$0xff]
    %v122 = vld [vmem:[#allocation5 + $0x1a0] sm:$0xff]
    %v123 = vld [vmem:[#allocation5 + $0x1a8] sm:$0xff]
    %v124 = vld [vmem:[#allocation5 + $0x1b0] sm:$0xff]
    %v125 = vld [vmem:[#allocation5 + $0x1b8] sm:$0xff]
    %v126 = vld [vmem:[#allocation5 + $0x1c0] sm:$0xff]
    %v127 = vld [vmem:[#allocation5 + $0x1c8] sm:$0xff]
    %v128 = vld [vmem:[#allocation5 + $0x1d0] sm:$0xff]
    %v129 = vld [vmem:[#allocation5 + $0x1d8] sm:$0xff]
    %v130 = vld [vmem:[#allocation5 + $0x1e0] sm:$0xff]
    %v131 = vld [vmem:[#allocation5 + $0x1e8] sm:$0xff]
    %v132 = vld [vmem:[#allocation5 + $0x1f0] sm:$0xff]
    %v133 = vld [vmem:[#allocation5 + $0x1f8] sm:$0xff]
    %v134 = vld [vmem:[#allocation5 + $0x200] sm:$0xff]
    %v135 = vld [vmem:[#allocation5 + $0x208] sm:$0xff]
    %v136 = vld [vmem:[#allocation5 + $0x210] sm:$0xff]
    %v137 = vld [vmem:[#allocation5 + $0x218] sm:$0xff]
    %v138 = vld [vmem:[#allocation5 + $0x220] sm:$0xff]
    %v139 = vld [vmem:[#allocation5 + $0x228] sm:$0xff]
    %v140 = vld [vmem:[#allocation5 + $0x230] sm:$0xff]
    %v141 = vld [vmem:[#allocation5 + $0x238] sm:$0xff]
    %v142 = vld [vmem:[#allocation5 + $0x240] sm:$0xff]
    %v143 = vld [vmem:[#allocation5 + $0x248] sm:$0xff]
    %v144 = vld [vmem:[#allocation5 + $0x250] sm:$0xff]
    %v145 = vld [vmem:[#allocation5 + $0x258] sm:$0xff]
    %v146 = vld [vmem:[#allocation5 + $0x260] sm:$0xff]
    %v147 = vld [vmem:[#allocation5 + $0x268] sm:$0xff]
    %v148 = vld [vmem:[#allocation5 + $0x270] sm:$0xff]
    %v149 = vld [vmem:[#allocation5 + $0x278] sm:$0xff]
    %v150 = vld [vmem:[#allocation7] sm:$0xff]
    %v151 = vld [vmem:[#allocation7 + $0x8] sm:$0xff]
    %v152 = vld [vmem:[#allocation7 + $0x10] sm:$0xff]
    %v153 = vld [vmem:[#allocation7 + $0x18] sm:$0xff]
    %v154 = vld [vmem:[#allocation7 + $0x20] sm:$0xff]
    %v155 = vld [vmem:[#allocation7 + $0x28] sm:$0xff]
    %v156 = vld [vmem:[#allocation7 + $0x30] sm:$0xff]
    %v157 = vld [vmem:[#allocation7 + $0x38] sm:$0xff]
    %v158 = vld [vmem:[#allocation7 + $0x40] sm:$0xff]
    %v159 = vld [vmem:[#allocation7 + $0x48] sm:$0xff]
    %v160 = vld [vmem:[#allocation7 + $0x50] sm:$0xff]
    %v161 = vld [vmem:[#allocation7 + $0x58] sm:$0xff]
    %v162 = vld [vmem:[#allocation7 + $0x60] sm:$0xff]
    %v163 = vld [vmem:[#allocation7 + $0x68] sm:$0xff]
    %v164 = vld [vmem:[#allocation7 + $0x70] sm:$0xff]
    %v165 = vld [vmem:[#allocation7 + $0x78] sm:$0xff]
    %v166 = vld [vmem:[#allocation7 + $0x80] sm:$0xff]
    %v167 = vld [vmem:[#allocation7 + $0x88] sm:$0xff]
    %v168 = vld [vmem:[#allocation7 + $0x90] sm:$0xff]
    %v169 = vld [vmem:[#allocation7 + $0x98] sm:$0xff]
    %v170 = vld [vmem:[#allocation7 + $0xa0] sm:$0xff]
    %v171 = vld [vmem:[#allocation7 + $0xa8] sm:$0xff]
    %v172 = vld [vmem:[#allocation7 + $0xb0] sm:$0xff]
    %v173 = vld [vmem:[#allocation7 + $0xb8] sm:$0xff]
    %v174 = vld [vmem:[#allocation7 + $0xc0] sm:$0xff]
    %v175 = vld [vmem:[#allocation7 + $0xc8] sm:$0xff]
    %v176 = vld [vmem:[#allocation7 + $0xd0] sm:$0xff]
    %v177 = vld [vmem:[#allocation7 + $0xd8] sm:$0xff]
    %v178 = vld [vmem:[#allocation7 + $0xe0] sm:$0xff]
    %v179 = vld [vmem:[#allocation7 + $0xe8] sm:$0xff]
    %v180 = vld [vmem:[#allocation7 + $0xf0] sm:$0xff]
    %v181 = vld [vmem:[#allocation7 + $0xf8] sm:$0xff]
    %v182 = vld [vmem:[#allocation7 + $0x100] sm:$0xff]
    %v183 = vld [vmem:[#allocation7 + $0x108] sm:$0xff]
    %v184 = vld [vmem:[#allocation7 + $0x110] sm:$0xff]
    %v185 = vld [vmem:[#allocation7 + $0x118] sm:$0xff]
    %v186 = vld [vmem:[#allocation7 + $0x120] sm:$0xff]
    %v187 = vld [vmem:[#allocation7 + $0x128] sm:$0xff]
    %v188 = vld [vmem:[#allocation7 + $0x130] sm:$0xff]
    %v189 = vld [vmem:[#allocation7 + $0x138] sm:$0xff]
    %v190 = vld [vmem:[#allocation7 + $0x140] sm:$0xff]
    %v191 = vld [vmem:[#allocation7 + $0x148] sm:$0xff]
    %v192 = vld [vmem:[#allocation7 + $0x150] sm:$0xff]
    %v193 = vld [vmem:[#allocation7 + $0x158] sm:$0xff]
    %v194 = vld [vmem:[#allocation7 + $0x160] sm:$0xff]
    %v195 = vld [vmem:[#allocation7 + $0x168] sm:$0xff]
    %v196 = vld [vmem:[#allocation7 + $0x170] sm:$0xff]
    %v197 = vld [vmem:[#allocation7 + $0x178] sm:$0xff]
    %v198 = vld [vmem:[#allocation7 + $0x180] sm:$0xff]
    %v199 = vld [vmem:[#allocation7 + $0x188] sm:$0xff]
    %v200 = vld [vmem:[#allocation7 + $0x190] sm:$0xff]
    %v201 = vld [vmem:[#allocation7 + $0x198] sm:$0xff]
    %v202 = vld [vmem:[#allocation7 + $0x1a0] sm:$0xff]
    %v203 = vld [vmem:[#allocation7 + $0x1a8] sm:$0xff]
    %v204 = vld [vmem:[#allocation7 + $0x1b0] sm:$0xff]
    %v205 = vld [vmem:[#allocation7 + $0x1b8] sm:$0xff]
    %v206 = vld [vmem:[#allocation7 + $0x1c0] sm:$0xff]
    %v207 = vld [vmem:[#allocation7 + $0x1c8] sm:$0xff]
    %v208 = vld [vmem:[#allocation7 + $0x1d0] sm:$0xff]
    %v209 = vld [vmem:[#allocation7 + $0x1d8] sm:$0xff]
    %v210 = vld [vmem:[#allocation7 + $0x1e0] sm:$0xff]
    %v211 = vld [vmem:[#allocation7 + $0x1e8] sm:$0xff]
    %v212 = vld [vmem:[#allocation7 + $0x1f0] sm:$0xff]
    %v213 = vld [vmem:[#allocation7 + $0x1f8] sm:$0xff]
    %v214 = vld [vmem:[#allocation7 + $0x200] sm:$0xff]
    %v215 = vld [vmem:[#allocation7 + $0x208] sm:$0xff]
    %v216 = vld [vmem:[#allocation7 + $0x210] sm:$0xff]
    %v217 = vld [vmem:[#allocation7 + $0x218] sm:$0xff]
    %v218 = vld [vmem:[#allocation7 + $0x220] sm:$0xff]
    %v219 = vld [vmem:[#allocation7 + $0x228] sm:$0xff]
    %v220 = vld [vmem:[#allocation7 + $0x230] sm:$0xff]
    %v221 = vld [vmem:[#allocation7 + $0x238] sm:$0xff]
    %v222 = vld [vmem:[#allocation7 + $0x240] sm:$0xff]
    %v223 = vld [vmem:[#allocation7 + $0x248] sm:$0xff]
    %v224 = vld [vmem:[#allocation7 + $0x250] sm:$0xff]
    %v225 = vld [vmem:[#allocation7 + $0x258] sm:$0xff]
    %v226 = vld [vmem:[#allocation7 + $0x260] sm:$0xff]
    %v227 = vld [vmem:[#allocation7 + $0x268] sm:$0xff]
    %v228 = vld [vmem:[#allocation7 + $0x270] sm:$0xff]
    %v229 = vld [vmem:[#allocation7 + $0x278] sm:$0xff]
    %v230 = vxor.u32 %v150, 2147483648
    %v231 = vxor.u32 %v151, 2147483648
    %v232 = vxor.u32 %v152, 2147483648
    %v233 = vxor.u32 %v153, 2147483648
    %v234 = vxor.u32 %v154, 2147483648
    %v235 = vxor.u32 %v155, 2147483648
    %v236 = vxor.u32 %v156, 2147483648
    %v237 = vxor.u32 %v157, 2147483648
    %v238 = vxor.u32 %v158, 2147483648
    %v239 = vxor.u32 %v159, 2147483648
    %v240 = vxor.u32 %v160, 2147483648
    %v241 = vxor.u32 %v161, 2147483648
    %v242 = vxor.u32 %v162, 2147483648
    %v243 = vxor.u32 %v163, 2147483648
    %v244 = vxor.u32 %v164, 2147483648
    %v245 = vxor.u32 %v165, 2147483648
    %v246 = vxor.u32 %v166, 2147483648
    %v247 = vxor.u32 %v167, 2147483648
    %v248 = vxor.u32 %v168, 2147483648
    %v249 = vxor.u32 %v169, 2147483648
    %v250 = vxor.u32 %v170, 2147483648
    %v251 = vxor.u32 %v171, 2147483648
    %v252 = vxor.u32 %v172, 2147483648
    %v253 = vxor.u32 %v173, 2147483648
    %v254 = vxor.u32 %v174, 2147483648
    %v255 = vxor.u32 %v175, 2147483648
    %v256 = vxor.u32 %v176, 2147483648
    %v257 = vxor.u32 %v177, 2147483648
    %v258 = vxor.u32 %v178, 2147483648
    %v259 = vxor.u32 %v179, 2147483648
    %v260 = vxor.u32 %v180, 2147483648
    %v261 = vxor.u32 %v181, 2147483648
    %v262 = vxor.u32 %v182, 2147483648
    %v263 = vxor.u32 %v183, 2147483648
    %v264 = vxor.u32 %v184, 2147483648
    %v265 = vxor.u32 %v185, 2147483648
    %v266 = vxor.u32 %v186, 2147483648
    %v267 = vxor.u32 %v187, 2147483648
    %v268 = vxor.u32 %v188, 2147483648
    %v269 = vxor.u32 %v189, 2147483648
    %v270 = vxor.u32 %v190, 2147483648
    %v271 = vxor.u32 %v191, 2147483648
    %v272 = vxor.u32 %v192, 2147483648
    %v273 = vxor.u32 %v193, 2147483648
    %v274 = vxor.u32 %v194, 2147483648
    %v275 = vxor.u32 %v195, 2147483648
    %v276 = vxor.u32 %v196, 2147483648
    %v277 = vxor.u32 %v197, 2147483648
    %v278 = vxor.u32 %v198, 2147483648
    %v279 = vxor.u32 %v199, 2147483648
    %v280 = vxor.u32 %v200, 2147483648
    %v281 = vxor.u32 %v201, 2147483648
    %v282 = vxor.u32 %v202, 2147483648
    %v283 = vxor.u32 %v203, 2147483648
    %v284 = vxor.u32 %v204, 2147483648
    %v285 = vxor.u32 %v205, 2147483648
    %v286 = vxor.u32 %v206, 2147483648
    %v287 = vxor.u32 %v207, 2147483648
    %v288 = vxor.u32 %v208, 2147483648
    %v289 = vxor.u32 %v209, 2147483648
    %v290 = vxor.u32 %v210, 2147483648
    %v291 = vxor.u32 %v211, 2147483648
    %v292 = vxor.u32 %v212, 2147483648
    %v293 = vxor.u32 %v213, 2147483648
    %v294 = vxor.u32 %v214, 2147483648
    %v295 = vxor.u32 %v215, 2147483648
    %v296 = vxor.u32 %v216, 2147483648
    %v297 = vxor.u32 %v217, 2147483648
    %v298 = vxor.u32 %v218, 2147483648
    %v299 = vxor.u32 %v219, 2147483648
    %v300 = vxor.u32 %v220, 2147483648
    %v301 = vxor.u32 %v221, 2147483648
    %v302 = vxor.u32 %v222, 2147483648
    %v303 = vxor.u32 %v223, 2147483648
    %v304 = vxor.u32 %v224, 2147483648
    %v305 = vxor.u32 %v225, 2147483648
    %v306 = vxor.u32 %v226, 2147483648
    %v307 = vxor.u32 %v227, 2147483648
    %v308 = vxor.u32 %v228, 2147483648
    %v309 = vxor.u32 %v229, 2147483648
    %v310 = vmul.f32 %v230, 1.442695
    %v311 = vpow.pop %v310
    %v312 = vmul.f32 %v231, 1.442695
    %v313 = vpow.pop %v312
    %v314 = vmul.f32 %v232, 1.442695
    %v315 = vpow.pop %v314
    %v316 = vmul.f32 %v233, 1.442695
    %v317 = vpow.pop %v316
    %v318 = vmul.f32 %v234, 1.442695
    %v319 = vpow.pop %v318
    %v320 = vmul.f32 %v235, 1.442695
    %v321 = vpow.pop %v320
    %v322 = vmul.f32 %v236, 1.442695
    %v323 = vpow.pop %v322
    %v324 = vmul.f32 %v237, 1.442695
    %v325 = vpow.pop %v324
    %v326 = vmul.f32 %v238, 1.442695
    %v327 = vpow.pop %v326
    %v328 = vmul.f32 %v239, 1.442695
    %v329 = vpow.pop %v328
    %v330 = vmul.f32 %v240, 1.442695
    %v331 = vpow.pop %v330
    %v332 = vmul.f32 %v241, 1.442695
    %v333 = vpow.pop %v332
    %v334 = vmul.f32 %v242, 1.442695
    %v335 = vpow.pop %v334
    %v336 = vmul.f32 %v243, 1.442695
    %v337 = vpow.pop %v336
    %v338 = vmul.f32 %v244, 1.442695
    %v339 = vpow.pop %v338
    %v340 = vmul.f32 %v245, 1.442695
    %v341 = vpow.pop %v340
    %v342 = vmul.f32 %v246, 1.442695
    %v343 = vpow.pop %v342
    %v344 = vmul.f32 %v247, 1.442695
    %v345 = vpow.pop %v344
    %v346 = vmul.f32 %v248, 1.442695
    %v347 = vpow.pop %v346
    %v348 = vmul.f32 %v249, 1.442695
    %v349 = vpow.pop %v348
    %v350 = vmul.f32 %v250, 1.442695
    %v351 = vpow.pop %v350
    %v352 = vmul.f32 %v251, 1.442695
    %v353 = vpow.pop %v352
    %v354 = vmul.f32 %v252, 1.442695
    %v355 = vpow.pop %v354
    %v356 = vmul.f32 %v253, 1.442695
    %v357 = vpow.pop %v356
    %v358 = vmul.f32 %v254, 1.442695
    %v359 = vpow.pop %v358
    %v360 = vmul.f32 %v255, 1.442695
    %v361 = vpow.pop %v360
    %v362 = vmul.f32 %v256, 1.442695
    %v363 = vpow.pop %v362
    %v364 = vmul.f32 %v257, 1.442695
    %v365 = vpow.pop %v364
    %v366 = vmul.f32 %v258, 1.442695
    %v367 = vpow.pop %v366
    %v368 = vmul.f32 %v259, 1.442695
    %v369 = vpow.pop %v368
    %v370 = vmul.f32 %v260, 1.442695
    %v371 = vpow.pop %v370
    %v372 = vmul.f32 %v261, 1.442695
    %v373 = vpow.pop %v372
    %v374 = vmul.f32 %v262, 1.442695
    %v375 = vpow.pop %v374
    %v376 = vmul.f32 %v263, 1.442695
    %v377 = vpow.pop %v376
    %v378 = vmul.f32 %v264, 1.442695
    %v379 = vpow.pop %v378
    %v380 = vmul.f32 %v265, 1.442695
    %v381 = vpow.pop %v380
    %v382 = vmul.f32 %v266, 1.442695
    %v383 = vpow.pop %v382
    %v384 = vmul.f32 %v267, 1.442695
    %v385 = vpow.pop %v384
    %v386 = vmul.f32 %v268, 1.442695
    %v387 = vpow.pop %v386
    %v388 = vmul.f32 %v269, 1.442695
    %v389 = vpow.pop %v388
    %v390 = vmul.f32 %v270, 1.442695
    %v391 = vpow.pop %v390
    %v392 = vmul.f32 %v271, 1.442695
    %v393 = vpow.pop %v392
    %v394 = vmul.f32 %v272, 1.442695
    %v395 = vpow.pop %v394
    %v396 = vmul.f32 %v273, 1.442695
    %v397 = vpow.pop %v396
    %v398 = vmul.f32 %v274, 1.442695
    %v399 = vpow.pop %v398
    %v400 = vmul.f32 %v275, 1.442695
    %v401 = vpow.pop %v400
    %v402 = vmul.f32 %v276, 1.442695
    %v403 = vpow.pop %v402
    %v404 = vmul.f32 %v277, 1.442695
    %v405 = vpow.pop %v404
    %v406 = vmul.f32 %v278, 1.442695
    %v407 = vpow.pop %v406
    %v408 = vmul.f32 %v279, 1.442695
    %v409 = vpow.pop %v408
    %v410 = vmul.f32 %v280, 1.442695
    %v411 = vpow.pop %v410
    %v412 = vmul.f32 %v281, 1.442695
    %v413 = vpow.pop %v412
    %v414 = vmul.f32 %v282, 1.442695
    %v415 = vpow.pop %v414
    %v416 = vmul.f32 %v283, 1.442695
    %v417 = vpow.pop %v416
    %v418 = vmul.f32 %v284, 1.442695
    %v419 = vpow.pop %v418
    %v420 = vmul.f32 %v285, 1.442695
    %v421 = vpow.pop %v420
    %v422 = vmul.f32 %v286, 1.442695
    %v423 = vpow.pop %v422
    %v424 = vmul.f32 %v287, 1.442695
    %v425 = vpow.pop %v424
    %v426 = vmul.f32 %v288, 1.442695
    %v427 = vpow.pop %v426
    %v428 = vmul.f32 %v289, 1.442695
    %v429 = vpow.pop %v428
    %v430 = vmul.f32 %v290, 1.442695
    %v431 = vpow.pop %v430
    %v432 = vmul.f32 %v291, 1.442695
    %v433 = vpow.pop %v432
    %v434 = vmul.f32 %v292, 1.442695
    %v435 = vpow.pop %v434
    %v436 = vmul.f32 %v293, 1.442695
    %v437 = vpow.pop %v436
    %v438 = vmul.f32 %v294, 1.442695
    %v439 = vpow.pop %v438
    %v440 = vmul.f32 %v295, 1.442695
    %v441 = vpow.pop %v440
    %v442 = vmul.f32 %v296, 1.442695
    %v443 = vpow.pop %v442
    %v444 = vmul.f32 %v297, 1.442695
    %v445 = vpow.pop %v444
    %v446 = vmul.f32 %v298, 1.442695
    %v447 = vpow.pop %v446
    %v448 = vmul.f32 %v299, 1.442695
    %v449 = vpow.pop %v448
    %v450 = vmul.f32 %v300, 1.442695
    %v451 = vpow.pop %v450
    %v452 = vmul.f32 %v301, 1.442695
    %v453 = vpow.pop %v452
    %v454 = vmul.f32 %v302, 1.442695
    %v455 = vpow.pop %v454
    %v456 = vmul.f32 %v303, 1.442695
    %v457 = vpow.pop %v456
    %v458 = vmul.f32 %v304, 1.442695
    %v459 = vpow.pop %v458
    %v460 = vmul.f32 %v305, 1.442695
    %v461 = vpow.pop %v460
    %v462 = vmul.f32 %v306, 1.442695
    %v463 = vpow.pop %v462
    %v464 = vmul.f32 %v307, 1.442695
    %v465 = vpow.pop %v464
    %v466 = vmul.f32 %v308, 1.442695
    %v467 = vpow.pop %v466
    %v468 = vmul.f32 %v309, 1.442695
    %v469 = vpow.pop %v468
    %v470 = vadd.f32 %v311, 1.0
    %v471 = vadd.f32 %v313, 1.0
    %v472 = vadd.f32 %v315, 1.0
    %v473 = vadd.f32 %v317, 1.0
    %v474 = vadd.f32 %v319, 1.0
    %v475 = vadd.f32 %v321, 1.0
    %v476 = vadd.f32 %v323, 1.0
    %v477 = vadd.f32 %v325, 1.0
    %v478 = vadd.f32 %v327, 1.0
    %v479 = vadd.f32 %v329, 1.0
    %v480 = vadd.f32 %v331, 1.0
    %v481 = vadd.f32 %v333, 1.0
    %v482 = vadd.f32 %v335, 1.0
    %v483 = vadd.f32 %v337, 1.0
    %v484 = vadd.f32 %v339, 1.0
    %v485 = vadd.f32 %v341, 1.0
    %v486 = vadd.f32 %v343, 1.0
    %v487 = vadd.f32 %v345, 1.0
    %v488 = vadd.f32 %v347, 1.0
    %v489 = vadd.f32 %v349, 1.0
    %v490 = vadd.f32 %v351, 1.0
    %v491 = vadd.f32 %v353, 1.0
    %v492 = vadd.f32 %v355, 1.0
    %v493 = vadd.f32 %v357, 1.0
    %v494 = vadd.f32 %v359, 1.0
    %v495 = vadd.f32 %v361, 1.0
    %v496 = vadd.f32 %v363, 1.0
    %v497 = vadd.f32 %v365, 1.0
    %v498 = vadd.f32 %v367, 1.0
    %v499 = vadd.f32 %v369, 1.0
    %v500 = vadd.f32 %v371, 1.0
    %v501 = vadd.f32 %v373, 1.0
    %v502 = vadd.f32 %v375, 1.0
    %v503 = vadd.f32 %v377, 1.0
    %v504 = vadd.f32 %v379, 1.0
    %v505 = vadd.f32 %v381, 1.0
    %v506 = vadd.f32 %v383, 1.0
    %v507 = vadd.f32 %v385, 1.0
    %v508 = vadd.f32 %v387, 1.0
    %v509 = vadd.f32 %v389, 1.0
    %v510 = vadd.f32 %v391, 1.0
    %v511 = vadd.f32 %v393, 1.0
    %v512 = vadd.f32 %v395, 1.0
    %v513 = vadd.f32 %v397, 1.0
    %v514 = vadd.f32 %v399, 1.0
    %v515 = vadd.f32 %v401, 1.0
    %v516 = vadd.f32 %v403, 1.0
    %v517 = vadd.f32 %v405, 1.0
    %v518 = vadd.f32 %v407, 1.0
    %v519 = vadd.f32 %v409, 1.0
    %v520 = vadd.f32 %v411, 1.0
    %v521 = vadd.f32 %v413, 1.0
    %v522 = vadd.f32 %v415, 1.0
    %v523 = vadd.f32 %v417, 1.0
    %v524 = vadd.f32 %v419, 1.0
    %v525 = vadd.f32 %v421, 1.0
    %v526 = vadd.f32 %v423, 1.0
    %v527 = vadd.f32 %v425, 1.0
    %v528 = vadd.f32 %v427, 1.0
    %v529 = vadd.f32 %v429, 1.0
    %v530 = vadd.f32 %v431, 1.0
    %v531 = vadd.f32 %v433, 1.0
    %v532 = vadd.f32 %v435, 1.0
    %v533 = vadd.f32 %v437, 1.0
    %v534 = vadd.f32 %v439, 1.0
    %v535 = vadd.f32 %v441, 1.0
    %v536 = vadd.f32 %v443, 1.0
    %v537 = vadd.f32 %v445, 1.0
    %v538 = vadd.f32 %v447, 1.0
    %v539 = vadd.f32 %v449, 1.0
    %v540 = vadd.f32 %v451, 1.0
    %v541 = vadd.f32 %v453, 1.0
    %v542 = vadd.f32 %v455, 1.0
    %v543 = vadd.f32 %v457, 1.0
    %v544 = vadd.f32 %v459, 1.0
    %v545 = vadd.f32 %v461, 1.0
    %v546 = vadd.f32 %v463, 1.0
    %v547 = vadd.f32 %v465, 1.0
    %v548 = vadd.f32 %v467, 1.0
    %v549 = vadd.f32 %v469, 1.0
    %v550 = vrcp.pop %v470
    %v551 = vmul.f32 1.0, %v550
    %v552 = vrcp.pop %v471
    %v553 = vmul.f32 1.0, %v552
    %v554 = vrcp.pop %v472
    %v555 = vmul.f32 1.0, %v554
    %v556 = vrcp.pop %v473
    %v557 = vmul.f32 1.0, %v556
    %v558 = vrcp.pop %v474
    %v559 = vmul.f32 1.0, %v558
    %v560 = vrcp.pop %v475
    %v561 = vmul.f32 1.0, %v560
    %v562 = vrcp.pop %v476
    %v563 = vmul.f32 1.0, %v562
    %v564 = vrcp.pop %v477
    %v565 = vmul.f32 1.0, %v564
    %v566 = vrcp.pop %v478
    %v567 = vmul.f32 1.0, %v566
    %v568 = vrcp.pop %v479
    %v569 = vmul.f32 1.0, %v568
    %v570 = vrcp.pop %v480
    %v571 = vmul.f32 1.0, %v570
    %v572 = vrcp.pop %v481
    %v573 = vmul.f32 1.0, %v572
    %v574 = vrcp.pop %v482
    %v575 = vmul.f32 1.0, %v574
    %v576 = vrcp.pop %v483
    %v577 = vmul.f32 1.0, %v576
    %v578 = vrcp.pop %v484
    %v579 = vmul.f32 1.0, %v578
    %v580 = vrcp.pop %v485
    %v581 = vmul.f32 1.0, %v580
    %v582 = vrcp.pop %v486
    %v583 = vmul.f32 1.0, %v582
    %v584 = vrcp.pop %v487
    %v585 = vmul.f32 1.0, %v584
    %v586 = vrcp.pop %v488
    %v587 = vmul.f32 1.0, %v586
    %v588 = vrcp.pop %v489
    %v589 = vmul.f32 1.0, %v588
    %v590 = vrcp.pop %v490
    %v591 = vmul.f32 1.0, %v590
    %v592 = vrcp.pop %v491
    %v593 = vmul.f32 1.0, %v592
    %v594 = vrcp.pop %v492
    %v595 = vmul.f32 1.0, %v594
    %v596 = vrcp.pop %v493
    %v597 = vmul.f32 1.0, %v596
    %v598 = vrcp.pop %v494
    %v599 = vmul.f32 1.0, %v598
    %v600 = vrcp.pop %v495
    %v601 = vmul.f32 1.0, %v600
    %v602 = vrcp.pop %v496
    %v603 = vmul.f32 1.0, %v602
    %v604 = vrcp.pop %v497
    %v605 = vmul.f32 1.0, %v604
    %v606 = vrcp.pop %v498
    %v607 = vmul.f32 1.0, %v606
    %v608 = vrcp.pop %v499
    %v609 = vmul.f32 1.0, %v608
    %v610 = vrcp.pop %v500
    %v611 = vmul.f32 1.0, %v610
    %v612 = vrcp.pop %v501
    %v613 = vmul.f32 1.0, %v612
    %v614 = vrcp.pop %v502
    %v615 = vmul.f32 1.0, %v614
    %v616 = vrcp.pop %v503
    %v617 = vmul.f32 1.0, %v616
    %v618 = vrcp.pop %v504
    %v619 = vmul.f32 1.0, %v618
    %v620 = vrcp.pop %v505
    %v621 = vmul.f32 1.0, %v620
    %v622 = vrcp.pop %v506
    %v623 = vmul.f32 1.0, %v622
    %v624 = vrcp.pop %v507
    %v625 = vmul.f32 1.0, %v624
    %v626 = vrcp.pop %v508
    %v627 = vmul.f32 1.0, %v626
    %v628 = vrcp.pop %v509
    %v629 = vmul.f32 1.0, %v628
    %v630 = vrcp.pop %v510
    %v631 = vmul.f32 1.0, %v630
    %v632 = vrcp.pop %v511
    %v633 = vmul.f32 1.0, %v632
    %v634 = vrcp.pop %v512
    %v635 = vmul.f32 1.0, %v634
    %v636 = vrcp.pop %v513
    %v637 = vmul.f32 1.0, %v636
    %v638 = vrcp.pop %v514
    %v639 = vmul.f32 1.0, %v638
    %v640 = vrcp.pop %v515
    %v641 = vmul.f32 1.0, %v640
    %v642 = vrcp.pop %v516
    %v643 = vmul.f32 1.0, %v642
    %v644 = vrcp.pop %v517
    %v645 = vmul.f32 1.0, %v644
    %v646 = vrcp.pop %v518
    %v647 = vmul.f32 1.0, %v646
    %v648 = vrcp.pop %v519
    %v649 = vmul.f32 1.0, %v648
    %v650 = vrcp.pop %v520
    %v651 = vmul.f32 1.0, %v650
    %v652 = vrcp.pop %v521
    %v653 = vmul.f32 1.0, %v652
    %v654 = vrcp.pop %v522
    %v655 = vmul.f32 1.0, %v654
    %v656 = vrcp.pop %v523
    %v657 = vmul.f32 1.0, %v656
    %v658 = vrcp.pop %v524
    %v659 = vmul.f32 1.0, %v658
    %v660 = vrcp.pop %v525
    %v661 = vmul.f32 1.0, %v660
    %v662 = vrcp.pop %v526
    %v663 = vmul.f32 1.0, %v662
    %v664 = vrcp.pop %v527
    %v665 = vmul.f32 1.0, %v664
    %v666 = vrcp.pop %v528
    %v667 = vmul.f32 1.0, %v666
    %v668 = vrcp.pop %v529
    %v669 = vmul.f32 1.0, %v668
    %v670 = vrcp.pop %v530
    %v671 = vmul.f32 1.0, %v670
    %v672 = vrcp.pop %v531
    %v673 = vmul.f32 1.0, %v672
    %v674 = vrcp.pop %v532
    %v675 = vmul.f32 1.0, %v674
    %v676 = vrcp.pop %v533
    %v677 = vmul.f32 1.0, %v676
    %v678 = vrcp.pop %v534
    %v679 = vmul.f32 1.0, %v678
    %v680 = vrcp.pop %v535
    %v681 = vmul.f32 1.0, %v680
    %v682 = vrcp.pop %v536
    %v683 = vmul.f32 1.0, %v682
    %v684 = vrcp.pop %v537
    %v685 = vmul.f32 1.0, %v684
    %v686 = vrcp.pop %v538
    %v687 = vmul.f32 1.0, %v686
    %v688 = vrcp.pop %v539
    %v689 = vmul.f32 1.0, %v688
    %v690 = vrcp.pop %v540
    %v691 = vmul.f32 1.0, %v690
    %v692 = vrcp.pop %v541
    %v693 = vmul.f32 1.0, %v692
    %v694 = vrcp.pop %v542
    %v695 = vmul.f32 1.0, %v694
    %v696 = vrcp.pop %v543
    %v697 = vmul.f32 1.0, %v696
    %v698 = vrcp.pop %v544
    %v699 = vmul.f32 1.0, %v698
    %v700 = vrcp.pop %v545
    %v701 = vmul.f32 1.0, %v700
    %v702 = vrcp.pop %v546
    %v703 = vmul.f32 1.0, %v702
    %v704 = vrcp.pop %v547
    %v705 = vmul.f32 1.0, %v704
    %v706 = vrcp.pop %v548
    %v707 = vmul.f32 1.0, %v706
    %v708 = vrcp.pop %v549
    %v709 = vmul.f32 1.0, %v708
    %v710 = vmul.f32 %v70, %v551
    %v711 = vmul.f32 %v71, %v553
    %v712 = vmul.f32 %v72, %v555
    %v713 = vmul.f32 %v73, %v557
    %v714 = vmul.f32 %v74, %v559
    %v715 = vmul.f32 %v75, %v561
    %v716 = vmul.f32 %v76, %v563
    %v717 = vmul.f32 %v77, %v565
    %v718 = vmul.f32 %v78, %v567
    %v719 = vmul.f32 %v79, %v569
    %v720 = vmul.f32 %v80, %v571
    %v721 = vmul.f32 %v81, %v573
    %v722 = vmul.f32 %v82, %v575
    %v723 = vmul.f32 %v83, %v577
    %v724 = vmul.f32 %v84, %v579
    %v725 = vmul.f32 %v85, %v581
    %v726 = vmul.f32 %v86, %v583
    %v727 = vmul.f32 %v87, %v585
    %v728 = vmul.f32 %v88, %v587
    %v729 = vmul.f32 %v89, %v589
    %v730 = vmul.f32 %v90, %v591
    %v731 = vmul.f32 %v91, %v593
    %v732 = vmul.f32 %v92, %v595
    %v733 = vmul.f32 %v93, %v597
    %v734 = vmul.f32 %v94, %v599
    %v735 = vmul.f32 %v95, %v601
    %v736 = vmul.f32 %v96, %v603
    %v737 = vmul.f32 %v97, %v605
    %v738 = vmul.f32 %v98, %v607
    %v739 = vmul.f32 %v99, %v609
    %v740 = vmul.f32 %v100, %v611
    %v741 = vmul.f32 %v101, %v613
    %v742 = vmul.f32 %v102, %v615
    %v743 = vmul.f32 %v103, %v617
    %v744 = vmul.f32 %v104, %v619
    %v745 = vmul.f32 %v105, %v621
    %v746 = vmul.f32 %v106, %v623
    %v747 = vmul.f32 %v107, %v625
    %v748 = vmul.f32 %v108, %v627
    %v749 = vmul.f32 %v109, %v629
    %v750 = vmul.f32 %v110, %v631
    %v751 = vmul.f32 %v111, %v633
    %v752 = vmul.f32 %v112, %v635
    %v753 = vmul.f32 %v113, %v637
    %v754 = vmul.f32 %v114, %v639
    %v755 = vmul.f32 %v115, %v641
    %v756 = vmul.f32 %v116, %v643
    %v757 = vmul.f32 %v117, %v645
    %v758 = vmul.f32 %v118, %v647
    %v759 = vmul.f32 %v119, %v649
    %v760 = vmul.f32 %v120, %v651
    %v761 = vmul.f32 %v121, %v653
    %v762 = vmul.f32 %v122, %v655
    %v763 = vmul.f32 %v123, %v657
    %v764 = vmul.f32 %v124, %v659
    %v765 = vmul.f32 %v125, %v661
    %v766 = vmul.f32 %v126, %v663
    %v767 = vmul.f32 %v127, %v665
    %v768 = vmul.f32 %v128, %v667
    %v769 = vmul.f32 %v129, %v669
    %v770 = vmul.f32 %v130, %v671
    %v771 = vmul.f32 %v131, %v673
    %v772 = vmul.f32 %v132, %v675
    %v773 = vmul.f32 %v133, %v677
    %v774 = vmul.f32 %v134, %v679
    %v775 = vmul.f32 %v135, %v681
    %v776 = vmul.f32 %v136, %v683
    %v777 = vmul.f32 %v137, %v685
    %v778 = vmul.f32 %v138, %v687
    %v779 = vmul.f32 %v139, %v689
    %v780 = vmul.f32 %v140, %v691
    %v781 = vmul.f32 %v141, %v693
    %v782 = vmul.f32 %v142, %v695
    %v783 = vmul.f32 %v143, %v697
    %v784 = vmul.f32 %v144, %v699
    %v785 = vmul.f32 %v145, %v701
    %v786 = vmul.f32 %v146, %v703
    %v787 = vmul.f32 %v147, %v705
    %v788 = vmul.f32 %v148, %v707
    %v789 = vmul.f32 %v149, %v709
    %v790 = vld [vmem:[#allocation8] sm:$0xff]
    %v791 = vld [vmem:[#allocation2] sm:$0xff]
    %v792 = vld [vmem:[#allocation2 + $0x8] sm:$0xff]
    %v793 = vld [vmem:[#allocation2 + $0x10] sm:$0xff]
    %v794 = vld [vmem:[#allocation2 + $0x18] sm:$0xff]
    %v795 = vld [vmem:[#allocation2 + $0x20] sm:$0xff]
    %v796 = vpack.c.bf16 %v791, %v791
    %v797 = vpack.c.bf16 %v792, %v792
    %v798 = vpack.c.bf16 %v793, %v793
    %v799 = vpack.c.bf16 %v794, %v794
    %v800 = vpack.c.bf16 %v795, %v795
    %v801 = vpack.c.bf16 %v715, %v710
    %v802 = vpack.c.bf16 %v716, %v711
    %v803 = vpack.c.bf16 %v717, %v712
    %v804 = vpack.c.bf16 %v718, %v713
    %v805 = vpack.c.bf16 %v719, %v714
    %v806 = vpack.c.bf16 %v725, %v720
    %v807 = vpack.c.bf16 %v726, %v721
    %v808 = vpack.c.bf16 %v727, %v722
    %v809 = vpack.c.bf16 %v728, %v723
    %v810 = vpack.c.bf16 %v729, %v724
    %v811 = vpack.c.bf16 %v735, %v730
    %v812 = vpack.c.bf16 %v736, %v731
    %v813 = vpack.c.bf16 %v737, %v732
    %v814 = vpack.c.bf16 %v738, %v733
    %v815 = vpack.c.bf16 %v739, %v734
    %v816 = vpack.c.bf16 %v745, %v740
    %v817 = vpack.c.bf16 %v746, %v741
    %v818 = vpack.c.bf16 %v747, %v742
    %v819 = vpack.c.bf16 %v748, %v743
    %v820 = vpack.c.bf16 %v749, %v744
    %v821 = vpack.c.bf16 %v755, %v750
    %v822 = vpack.c.bf16 %v756, %v751
    %v823 = vpack.c.bf16 %v757, %v752
    %v824 = vpack.c.bf16 %v758, %v753
    %v825 = vpack.c.bf16 %v759, %v754
    %v826 = vpack.c.bf16 %v765, %v760
    %v827 = vpack.c.bf16 %v766, %v761
    %v828 = vpack.c.bf16 %v767, %v762
    %v829 = vpack.c.bf16 %v768, %v763
    %v830 = vpack.c.bf16 %v769, %v764
    %v831 = vpack.c.bf16 %v775, %v770
    %v832 = vpack.c.bf16 %v776, %v771
    %v833 = vpack.c.bf16 %v777, %v772
    %v834 = vpack.c.bf16 %v778, %v773
    %v835 = vpack.c.bf16 %v779, %v774
    %v836 = vpack.c.bf16 %v785, %v780
    %v837 = vpack.c.bf16 %v786, %v781
    %v838 = vpack.c.bf16 %v787, %v782
    %v839 = vpack.c.bf16 %v788, %v783
    %v840 = vpack.c.bf16 %v789, %v784
    %841 = vmatprep.subr.bf16.mxu0 %v837
    %842 = vmatpush1.bf16.xpose.msra.mxu0 %v836
    %843 = vmatprep.subr.bf16.mxu0 %v832
    %844 = vmatpush1.bf16.xpose.msra.mxu0 %v831
    %845 = vmatprep.subr.bf16.mxu0 %v827
    %846 = vmatpush1.bf16.xpose.msra.mxu0 %v826
    %847 = vmatprep.subr.bf16.mxu0 %v822
    %848 = vmatpush1.bf16.xpose.msra.mxu0 %v821
    %849 = vmatprep.subr.bf16.mxu0 %v817
    %850 = vmatpush1.bf16.xpose.msra.mxu0 %v816
    %851 = vmatprep.subr.bf16.mxu0 %v812
    %852 = vmatpush1.bf16.xpose.msra.mxu0 %v811
    %853 = vmatprep.subr.bf16.mxu0 %v807
    %854 = vmatpush1.bf16.xpose.msra.mxu0 %v806
    %855 = vmatprep.subr.bf16.mxu0 %v802
    %856 = vmatpush1.bf16.xpose.msra.mxu0 %v801
    %857 = vmatprep.subr.bf16.mxu0 0
    %858 = vmatpush2.bf16.xpose.msra.mxu0 0
    %859 = vmatprep.subr.bf16.mxu0 0
    %860 = vmatpush2.bf16.xpose.msra.mxu0 0
    %861 = vmatprep.subr.bf16.mxu0 0
    %862 = vmatpush2.bf16.xpose.msra.mxu0 0
    %863 = vmatprep.subr.bf16.mxu0 0
    %864 = vmatpush2.bf16.xpose.msra.mxu0 0
    %865 = vmatprep.subr.bf16.mxu0 0
    %866 = vmatpush2.bf16.xpose.msra.mxu0 0
    %867 = vmatprep.subr.bf16.mxu0 0
    %868 = vmatpush2.bf16.xpose.msra.mxu0 0
    %869 = vmatprep.subr.bf16.mxu0 0
    %870 = vmatpush2.bf16.xpose.msra.mxu0 0
    %871 = vmatprep.subr.bf16.mxu0 0
    %872 = vmatpush2.bf16.xpose.msra.mxu0 0
    %873 = vmatprep.mubr.bf16.mxu0 %v797
    %874 = vmatmul.mubr.bf16.gmra.mxu0 %v796
    %v875 = vpop.f32.mrf.mxu0
    %v876 = vadd.f32 0.0, %v875
    %v877 = vpop.f32.mrf.mxu0
    %v878 = vpop.f32.mrf.mxu0
    %v879 = vpop.f32.mrf.mxu0
    %880 = vdwg.mxu0
    %881 = vmatprep.subr.bf16.mxu0 %v839
    %882 = vmatpush1.bf16.xpose.msra.mxu0 %v838
    %883 = vmatprep.subr.bf16.mxu0 %v834
    %884 = vmatpush1.bf16.xpose.msra.mxu0 %v833
    %885 = vmatprep.subr.bf16.mxu0 %v829
    %886 = vmatpush1.bf16.xpose.msra.mxu0 %v828
    %887 = vmatprep.subr.bf16.mxu0 %v824
    %888 = vmatpush1.bf16.xpose.msra.mxu0 %v823
    %889 = vmatprep.subr.bf16.mxu0 %v819
    %890 = vmatpush1.bf16.xpose.msra.mxu0 %v818
    %891 = vmatprep.subr.bf16.mxu0 %v814
    %892 = vmatpush1.bf16.xpose.msra.mxu0 %v813
    %893 = vmatprep.subr.bf16.mxu0 %v809
    %894 = vmatpush1.bf16.xpose.msra.mxu0 %v808
    %895 = vmatprep.subr.bf16.mxu0 %v804
    %896 = vmatpush1.bf16.xpose.msra.mxu0 %v803
    %897 = vmatprep.subr.bf16.mxu0 0
    %898 = vmatpush2.bf16.xpose.msra.mxu0 0
    %899 = vmatprep.subr.bf16.mxu0 0
    %900 = vmatpush2.bf16.xpose.msra.mxu0 0
    %901 = vmatprep.subr.bf16.mxu0 0
    %902 = vmatpush2.bf16.xpose.msra.mxu0 0
    %903 = vmatprep.subr.bf16.mxu0 0
    %904 = vmatpush2.bf16.xpose.msra.mxu0 0
    %905 = vmatprep.subr.bf16.mxu0 0
    %906 = vmatpush2.bf16.xpose.msra.mxu0 0
    %907 = vmatprep.subr.bf16.mxu0 0
    %908 = vmatpush2.bf16.xpose.msra.mxu0 0
    %909 = vmatprep.subr.bf16.mxu0 0
    %910 = vmatpush2.bf16.xpose.msra.mxu0 0
    %911 = vmatprep.subr.bf16.mxu0 0
    %912 = vmatpush2.bf16.xpose.msra.mxu0 0
    %913 = vmatprep.mubr.bf16.mxu0 %v799
    %914 = vmatmul.mubr.bf16.gmra.mxu0 %v798
    %v915 = vpop.f32.mrf.mxu0
    %v916 = vadd.f32 %v876, %v915
    %v917 = vpop.f32.mrf.mxu0
    %v918 = vpop.f32.mrf.mxu0
    %v919 = vpop.f32.mrf.mxu0
    %920 = vdwg.mxu0
    %921 = vmatprep.subr.bf16.mxu0 0
    %922 = vmatpush1.bf16.xpose.msra.mxu0 %v840
    %923 = vmatprep.subr.bf16.mxu0 0
    %924 = vmatpush1.bf16.xpose.msra.mxu0 %v835
    %925 = vmatprep.subr.bf16.mxu0 0
    %926 = vmatpush1.bf16.xpose.msra.mxu0 %v830
    %927 = vmatprep.subr.bf16.mxu0 0
    %928 = vmatpush1.bf16.xpose.msra.mxu0 %v825
    %929 = vmatprep.subr.bf16.mxu0 0
    %930 = vmatpush1.bf16.xpose.msra.mxu0 %v820
    %931 = vmatprep.subr.bf16.mxu0 0
    %932 = vmatpush1.bf16.xpose.msra.mxu0 %v815
    %933 = vmatprep.subr.bf16.mxu0 0
    %934 = vmatpush1.bf16.xpose.msra.mxu0 %v810
    %935 = vmatprep.subr.bf16.mxu0 0
    %936 = vmatpush1.bf16.xpose.msra.mxu0 %v805
    %937 = vmatprep.subr.bf16.mxu0 0
    %938 = vmatpush2.bf16.xpose.msra.mxu0 0
    %939 = vmatprep.subr.bf16.mxu0 0
    %940 = vmatpush2.bf16.xpose.msra.mxu0 0
    %941 = vmatprep.subr.bf16.mxu0 0
    %942 = vmatpush2.bf16.xpose.msra.mxu0 0
    %943 = vmatprep.subr.bf16.mxu0 0
    %944 = vmatpush2.bf16.xpose.msra.mxu0 0
    %945 = vmatprep.subr.bf16.mxu0 0
    %946 = vmatpush2.bf16.xpose.msra.mxu0 0
    %947 = vmatprep.subr.bf16.mxu0 0
    %948 = vmatpush2.bf16.xpose.msra.mxu0 0
    %949 = vmatprep.subr.bf16.mxu0 0
    %950 = vmatpush2.bf16.xpose.msra.mxu0 0
    %951 = vmatprep.subr.bf16.mxu0 0
    %952 = vmatpush2.bf16.xpose.msra.mxu0 0
    %953 = vmatprep.mubr.bf16.mxu0 0
    %954 = vmatmul.mubr.bf16.gmra.mxu0 %v800
    %v955 = vpop.f32.mrf.mxu0
    %v956 = vadd.f32 %v916, %v955
    %v957 = vpop.f32.mrf.mxu0
    %v958 = vpop.f32.mrf.mxu0
    %v959 = vpop.f32.mrf.mxu0
    %960 = vdwg.mxu0
    %v961 = vadd.f32 %v790, %v956
    %962 = vst [vmem:[#allocation8] sm:$0xff] %v961
    // Predicated region
    $region34: #{tpu_custom_call.1} parent=1 // pred_check
      _
    $region35: #{tpu_custom_call.1} parent=1 // pred_check_branch
      %964 = sbr.rel (0) target = $region37
    $region36: #{tpu_custom_call.1} parent=1 // pred_region
      %s966 = ssub.s32 128, 128
      %967 = vsyncadd [#allocation4], %s966
      %s969 = sshll.u32 [#allocation8], 4
      %s970 = int_to_ptr.vmem [resolvable:$true] %s969
      %972 = dma.vmem_to_hbm [thread:$0]  %s970, 128, %s4, [#allocation4]
    $region37: #{tpu_custom_call.1} parent=1 // pred_fallthru
      _
    // Predicated region
    $region38: #{tpu_custom_call.1} parent=1 // pred_check
      _
    $region39: #{tpu_custom_call.1} parent=1 // pred_check_branch
      %974 = sbr.rel (0) target = $region41
    $region40: #{tpu_custom_call.1} parent=1 // pred_region
      %975 = dma.done [#allocation4], 128
    $region41: #{tpu_custom_call.1} parent=1 // pred_fallthru
      _
    %976 = vsyncpa [#allocation3], 1
    %977 = vsyncpa [#allocation6], 1
    %978 = vsyncpa [#allocation4], 1

</llo_original>
